<compile_context>
chip_gen: v6e
topology: v6e:2x2x1
jax: 0.10.0
libtpu: 0.0.40
codegen_flags: <defaults>
</compile_context>

<pallas_src>
import jax
import jax.numpy as jnp
from jax import lax
from jax.experimental import pallas as pl
from jax.experimental.pallas import tpu as pltpu

KH = KW = 5  # fixed 5x5 kernel from nn.Conv2d(1, 1, 5)


def _make_conv_kernel(G, H, L):
    def conv2d_kernel(wb_ref, x_ref, o_ref):
        # wb_ref: (32,) SMEM -- wb[di*KW + dj] = w[di, dj], wb[25] = bias
        # x_ref : (G, H, L) VMEM -- L = P*W lanes, P images packed side by side
        # o_ref : (G, H, L) VMEM -- full-height / full-width block (unmasked
        #         vst); rows >= OH and per-image cols >= OW are wrap garbage
        #         and are cropped once in the wrapper.
        # Hoist the 25 weight scalars and the bias broadcast out of the loop.
        w = [wb_ref[k] for k in range(KH * KW)]
        bias_slab = jnp.full((H, L), wb_ref[KH * KW], dtype=jnp.float32)

        def body(g, carry):
            x = x_ref[g]                                   # (H, L), aligned vregs
            # 4 lane rolls (XLU), shared by all 5 kernel rows.  Lane wrap only
            # contaminates per-image output cols >= OW (cropped in wrapper).
            xc = [x]
            for dj in range(1, KW):
                xc.append(pltpu.roll(x, shift=L - dj, axis=1))

            acc = bias_slab
            for di in range(KH):
                # Horizontal 1-D conv for kernel row di: pure VALU on full,
                # aligned vregs (no sublane-unaligned slices).
                r = xc[0] * w[di * KW]
                for dj in range(1, KW):
                    r = r + xc[dj] * w[di * KW + dj]
                # Vertical shift by di as a single sublane roll (XLU slot).
                # Wrapped rows land only in output rows >= OH.
                if di:
                    r = pltpu.roll(r, shift=H - di, axis=0)
                acc = acc + r
            o_ref[g] = acc.astype(o_ref.dtype)
            return carry

        lax.fori_loop(0, G, body, 0)

    return conv2d_kernel


def conv2d_1x1x5_pallas(x_nchw, weight, bias):
    """x_nchw: (N, 1, H, W); weight: (1, 1, 5, 5); bias: (1,). Returns (N, 1, OH, OW)."""
    N, C, H, W = x_nchw.shape
    assert C == 1
    assert H >= KH and W >= KW
    OH, OW = H - KH + 1, W - KW + 1

    # --- lane packing: P images side-by-side along the 128-lane axis ---
    P = max(1, 128 // W)
    L = P * W
    num_packs = pl.cdiv(N, P)

    # --- choose packs-per-grid-step G ---
    # One pack block is H*L*4 bytes; in + out, double-buffered = 4 blocks.
    # Keep that comfortably inside every chip's scoped VMEM (v5e default
    # 16 MiB, v7x physical 64 MiB), and keep >= ~4 grid steps when there are
    # enough packs so the "parallel" axis can split across v7x's two TCs.
    pack_bytes = H * L * 4
    vmem_budget = 8 * 1024 * 1024
    g_cap = max(1, min(256, vmem_budget // (4 * pack_bytes)))
    if num_packs > 1:
        g_cap = min(g_cap, max(1, pl.cdiv(num_packs, 4)))
    G = max(1, min(g_cap, num_packs))
    grid_len = pl.cdiv(num_packs, G)
    num_packs_pad = grid_len * G
    N_pad = num_packs_pad * P

    x = x_nchw.reshape(N, H, W).astype(jnp.float32)
    if N_pad != N:
        # Zero-pad the batch so every pack / grid block is full.
        x = jnp.concatenate([x, jnp.zeros((N_pad - N, H, W), jnp.float32)], axis=0)
    # slab[q, h, p*W + w] = image (q*P + p) at pixel (h, w).
    # NOTE(perf): at large N these pack/unpack transposes are extra HBM passes;
    # keep the slab layout end-to-end across adjacent ops inside one jit if
    # this conv is part of a larger model (review item; irrelevant here).
    x_packed = (x.reshape(num_packs_pad, P, H, W)
                  .transpose(0, 2, 1, 3)
                  .reshape(num_packs_pad, H, L))

    # --- weights + bias flattened into one small 1-D SMEM array ---
    wb = jnp.zeros((32,), jnp.float32)
    wb = wb.at[:KH * KW].set(weight.reshape(-1).astype(jnp.float32))
    wb = wb.at[KH * KW].set(bias.reshape(()).astype(jnp.float32))

    out_slab = pl.pallas_call(
        _make_conv_kernel(G, H, L),
        out_shape=jax.ShapeDtypeStruct((num_packs_pad, H, L), jnp.float32),
        grid_spec=pltpu.PrefetchScalarGridSpec(
            num_scalar_prefetch=0,
            grid=(grid_len,),
            in_specs=[
                pl.BlockSpec(memory_space=pltpu.MemorySpace.SMEM),   # weights+bias
                pl.BlockSpec((G, H, L), lambda q: (q, 0, 0)),        # packed images
            ],
            out_specs=pl.BlockSpec((G, H, L), lambda q: (q, 0, 0)),
        ),
        compiler_params=pltpu.CompilerParams(
            dimension_semantics=("parallel",),
            vmem_limit_bytes=32 * 1024 * 1024),
    )(wb, x_packed)

    # --- unpack lanes back to per-image outputs; crop wrap rows/cols ---
    out = (out_slab.reshape(num_packs_pad, H, P, W)
                   .transpose(0, 2, 1, 3)
                   .reshape(N_pad, H, W)[:N, :OH, :OW])
    return out.reshape(N, 1, OH, OW)


if __name__ == "__main__":
    key = jax.random.PRNGKey(0)
    k_x, k_w, k_b = jax.random.split(key, 3)

    # Shapes consistent with Conv2d(1, 1, 5): N=2, C=1, H=W=16.
    N, C, H, W = 2, 1, 16, 16
    x = jax.random.normal(k_x, (N, C, H, W), dtype=jnp.float32)

    # Deterministic parameter init (PyTorch-style uniform bound = 1/sqrt(fan_in)).
    fan_in = C * KH * KW
    bound = 1.0 / (fan_in ** 0.5)
    weight = jax.random.uniform(k_w, (1, 1, KH, KW), jnp.float32, -bound, bound)
    bias = jax.random.uniform(k_b, (1,), jnp.float32, -bound, bound)

    def ref_conv(xx):
        return lax.conv_general_dilated(
            xx, weight, window_strides=(1, 1), padding="VALID",
            dimension_numbers=("NCHW", "OIHW", "NCHW")) + bias.reshape(1, 1, 1, 1)

    out = jax.block_until_ready(conv2d_1x1x5_pallas(x, weight, bias))
    assert out.shape == (N, 1, H - KH + 1, W - KW + 1)
    assert jnp.allclose(out, ref_conv(x), rtol=1e-5, atol=1e-5)

    # Also exercise the multi-pack / multi-grid-step path (G > 1, grid > 1,
    # batch padding) so the enlarged-block pipeline is validated too.
    N2 = 40
    x2 = jax.random.normal(jax.random.PRNGKey(1), (N2, C, H, W), dtype=jnp.float32)
    out2 = jax.block_until_ready(conv2d_1x1x5_pallas(x2, weight, bias))
    assert jnp.allclose(out2, ref_conv(x2), rtol=1e-5, atol=1e-5)

    print("KERNEL_OK")
</pallas_src>

<mosaic_0001>
module attributes {stable_mosaic.version = 11 : i64} {
  func.func @conv2d_kernel(%arg0: i32, %arg1: memref<32xf32, #tpu.memory_space<smem>>, %arg2: memref<1x16x128xf32, #tpu.memory_space<vmem>>, %arg3: memref<1x16x128xf32, #tpu.memory_space<vmem>>) attributes {dimension_semantics = [#tpu.dimension_semantics<parallel>], iteration_bounds = array<i64: 1>, scalar_prefetch = 0 : i64, scratch_operands = 0 : i64, tpu.core_type = #tpu.core_type<tc>, window_params = [{transform_indices = @transform_0, window_bounds = array<i64: 32>}, {transform_indices = @transform_1, window_bounds = array<i64: 1, 16, 128>}, {transform_indices = @transform_2, window_bounds = array<i64: 1, 16, 128>}]} {
    %c0 = arith.constant 0 : index
    %0 = memref.load %arg1[%c0] : memref<32xf32, #tpu.memory_space<smem>>
    %c1 = arith.constant 1 : index
    %1 = memref.load %arg1[%c1] : memref<32xf32, #tpu.memory_space<smem>>
    %c2 = arith.constant 2 : index
    %2 = memref.load %arg1[%c2] : memref<32xf32, #tpu.memory_space<smem>>
    %c3 = arith.constant 3 : index
    %3 = memref.load %arg1[%c3] : memref<32xf32, #tpu.memory_space<smem>>
    %c4 = arith.constant 4 : index
    %4 = memref.load %arg1[%c4] : memref<32xf32, #tpu.memory_space<smem>>
    %c5 = arith.constant 5 : index
    %5 = memref.load %arg1[%c5] : memref<32xf32, #tpu.memory_space<smem>>
    %c6 = arith.constant 6 : index
    %6 = memref.load %arg1[%c6] : memref<32xf32, #tpu.memory_space<smem>>
    %c7 = arith.constant 7 : index
    %7 = memref.load %arg1[%c7] : memref<32xf32, #tpu.memory_space<smem>>
    %c8 = arith.constant 8 : index
    %8 = memref.load %arg1[%c8] : memref<32xf32, #tpu.memory_space<smem>>
    %c9 = arith.constant 9 : index
    %9 = memref.load %arg1[%c9] : memref<32xf32, #tpu.memory_space<smem>>
    %c10 = arith.constant 10 : index
    %10 = memref.load %arg1[%c10] : memref<32xf32, #tpu.memory_space<smem>>
    %c11 = arith.constant 11 : index
    %11 = memref.load %arg1[%c11] : memref<32xf32, #tpu.memory_space<smem>>
    %c12 = arith.constant 12 : index
    %12 = memref.load %arg1[%c12] : memref<32xf32, #tpu.memory_space<smem>>
    %c13 = arith.constant 13 : index
    %13 = memref.load %arg1[%c13] : memref<32xf32, #tpu.memory_space<smem>>
    %c14 = arith.constant 14 : index
    %14 = memref.load %arg1[%c14] : memref<32xf32, #tpu.memory_space<smem>>
    %c15 = arith.constant 15 : index
    %15 = memref.load %arg1[%c15] : memref<32xf32, #tpu.memory_space<smem>>
    %c16 = arith.constant 16 : index
    %16 = memref.load %arg1[%c16] : memref<32xf32, #tpu.memory_space<smem>>
    %c17 = arith.constant 17 : index
    %17 = memref.load %arg1[%c17] : memref<32xf32, #tpu.memory_space<smem>>
    %c18 = arith.constant 18 : index
    %18 = memref.load %arg1[%c18] : memref<32xf32, #tpu.memory_space<smem>>
    %c19 = arith.constant 19 : index
    %19 = memref.load %arg1[%c19] : memref<32xf32, #tpu.memory_space<smem>>
    %c20 = arith.constant 20 : index
    %20 = memref.load %arg1[%c20] : memref<32xf32, #tpu.memory_space<smem>>
    %c21 = arith.constant 21 : index
    %21 = memref.load %arg1[%c21] : memref<32xf32, #tpu.memory_space<smem>>
    %c22 = arith.constant 22 : index
    %22 = memref.load %arg1[%c22] : memref<32xf32, #tpu.memory_space<smem>>
    %c23 = arith.constant 23 : index
    %23 = memref.load %arg1[%c23] : memref<32xf32, #tpu.memory_space<smem>>
    %c24 = arith.constant 24 : index
    %24 = memref.load %arg1[%c24] : memref<32xf32, #tpu.memory_space<smem>>
    %c25 = arith.constant 25 : index
    %25 = memref.load %arg1[%c25] : memref<32xf32, #tpu.memory_space<smem>>
    %26 = vector.broadcast %25 : f32 to vector<16x128xf32>
    %c0_i32 = arith.constant 0 : i32
    %27 = arith.index_cast %c0_i32 : i32 to index
    %c0_0 = arith.constant 0 : index
    %c0_1 = arith.constant 0 : index
    %28 = vector.load %arg2[%27, %c0_0, %c0_1] : memref<1x16x128xf32, #tpu.memory_space<vmem>>, vector<1x16x128xf32>
    %29 = vector.shape_cast %28 : vector<1x16x128xf32> to vector<16x128xf32>
    %c127_i32 = arith.constant 127 : i32
    %30 = tpu.dynamic_rotate %29 by %c127_i32 dim 1 : vector<16x128xf32>, i32 -> vector<16x128xf32>
    %c126_i32 = arith.constant 126 : i32
    %31 = tpu.dynamic_rotate %29 by %c126_i32 dim 1 : vector<16x128xf32>, i32 -> vector<16x128xf32>
    %c125_i32 = arith.constant 125 : i32
    %32 = tpu.dynamic_rotate %29 by %c125_i32 dim 1 : vector<16x128xf32>, i32 -> vector<16x128xf32>
    %c124_i32 = arith.constant 124 : i32
    %33 = tpu.dynamic_rotate %29 by %c124_i32 dim 1 : vector<16x128xf32>, i32 -> vector<16x128xf32>
    %34 = vector.broadcast %0 : f32 to vector<16x128xf32>
    %35 = arith.mulf %29, %34 : vector<16x128xf32>
    %36 = vector.broadcast %1 : f32 to vector<16x128xf32>
    %37 = arith.mulf %30, %36 : vector<16x128xf32>
    %38 = arith.addf %35, %37 : vector<16x128xf32>
    %39 = vector.broadcast %2 : f32 to vector<16x128xf32>
    %40 = arith.mulf %31, %39 : vector<16x128xf32>
    %41 = arith.addf %38, %40 : vector<16x128xf32>
    %42 = vector.broadcast %3 : f32 to vector<16x128xf32>
    %43 = arith.mulf %32, %42 : vector<16x128xf32>
    %44 = arith.addf %41, %43 : vector<16x128xf32>
    %45 = vector.broadcast %4 : f32 to vector<16x128xf32>
    %46 = arith.mulf %33, %45 : vector<16x128xf32>
    %47 = arith.addf %44, %46 : vector<16x128xf32>
    %48 = arith.addf %26, %47 : vector<16x128xf32>
    %49 = vector.broadcast %5 : f32 to vector<16x128xf32>
    %50 = arith.mulf %29, %49 : vector<16x128xf32>
    %51 = vector.broadcast %6 : f32 to vector<16x128xf32>
    %52 = arith.mulf %30, %51 : vector<16x128xf32>
    %53 = arith.addf %50, %52 : vector<16x128xf32>
    %54 = vector.broadcast %7 : f32 to vector<16x128xf32>
    %55 = arith.mulf %31, %54 : vector<16x128xf32>
    %56 = arith.addf %53, %55 : vector<16x128xf32>
    %57 = vector.broadcast %8 : f32 to vector<16x128xf32>
    %58 = arith.mulf %32, %57 : vector<16x128xf32>
    %59 = arith.addf %56, %58 : vector<16x128xf32>
    %60 = vector.broadcast %9 : f32 to vector<16x128xf32>
    %61 = arith.mulf %33, %60 : vector<16x128xf32>
    %62 = arith.addf %59, %61 : vector<16x128xf32>
    %c15_i32 = arith.constant 15 : i32
    %63 = tpu.dynamic_rotate %62 by %c15_i32 dim 0 : vector<16x128xf32>, i32 -> vector<16x128xf32>
    %64 = arith.addf %48, %63 : vector<16x128xf32>
    %65 = vector.broadcast %10 : f32 to vector<16x128xf32>
    %66 = arith.mulf %29, %65 : vector<16x128xf32>
    %67 = vector.broadcast %11 : f32 to vector<16x128xf32>
    %68 = arith.mulf %30, %67 : vector<16x128xf32>
    %69 = arith.addf %66, %68 : vector<16x128xf32>
    %70 = vector.broadcast %12 : f32 to vector<16x128xf32>
    %71 = arith.mulf %31, %70 : vector<16x128xf32>
    %72 = arith.addf %69, %71 : vector<16x128xf32>
    %73 = vector.broadcast %13 : f32 to vector<16x128xf32>
    %74 = arith.mulf %32, %73 : vector<16x128xf32>
    %75 = arith.addf %72, %74 : vector<16x128xf32>
    %76 = vector.broadcast %14 : f32 to vector<16x128xf32>
    %77 = arith.mulf %33, %76 : vector<16x128xf32>
    %78 = arith.addf %75, %77 : vector<16x128xf32>
    %c14_i32 = arith.constant 14 : i32
    %79 = tpu.dynamic_rotate %78 by %c14_i32 dim 0 : vector<16x128xf32>, i32 -> vector<16x128xf32>
    %80 = arith.addf %64, %79 : vector<16x128xf32>
    %81 = vector.broadcast %15 : f32 to vector<16x128xf32>
    %82 = arith.mulf %29, %81 : vector<16x128xf32>
    %83 = vector.broadcast %16 : f32 to vector<16x128xf32>
    %84 = arith.mulf %30, %83 : vector<16x128xf32>
    %85 = arith.addf %82, %84 : vector<16x128xf32>
    %86 = vector.broadcast %17 : f32 to vector<16x128xf32>
    %87 = arith.mulf %31, %86 : vector<16x128xf32>
    %88 = arith.addf %85, %87 : vector<16x128xf32>
    %89 = vector.broadcast %18 : f32 to vector<16x128xf32>
    %90 = arith.mulf %32, %89 : vector<16x128xf32>
    %91 = arith.addf %88, %90 : vector<16x128xf32>
    %92 = vector.broadcast %19 : f32 to vector<16x128xf32>
    %93 = arith.mulf %33, %92 : vector<16x128xf32>
    %94 = arith.addf %91, %93 : vector<16x128xf32>
    %c13_i32 = arith.constant 13 : i32
    %95 = tpu.dynamic_rotate %94 by %c13_i32 dim 0 : vector<16x128xf32>, i32 -> vector<16x128xf32>
    %96 = arith.addf %80, %95 : vector<16x128xf32>
    %97 = vector.broadcast %20 : f32 to vector<16x128xf32>
    %98 = arith.mulf %29, %97 : vector<16x128xf32>
    %99 = vector.broadcast %21 : f32 to vector<16x128xf32>
    %100 = arith.mulf %30, %99 : vector<16x128xf32>
    %101 = arith.addf %98, %100 : vector<16x128xf32>
    %102 = vector.broadcast %22 : f32 to vector<16x128xf32>
    %103 = arith.mulf %31, %102 : vector<16x128xf32>
    %104 = arith.addf %101, %103 : vector<16x128xf32>
    %105 = vector.broadcast %23 : f32 to vector<16x128xf32>
    %106 = arith.mulf %32, %105 : vector<16x128xf32>
    %107 = arith.addf %104, %106 : vector<16x128xf32>
    %108 = vector.broadcast %24 : f32 to vector<16x128xf32>
    %109 = arith.mulf %33, %108 : vector<16x128xf32>
    %110 = arith.addf %107, %109 : vector<16x128xf32>
    %c12_i32 = arith.constant 12 : i32
    %111 = tpu.dynamic_rotate %110 by %c12_i32 dim 0 : vector<16x128xf32>, i32 -> vector<16x128xf32>
    %112 = arith.addf %96, %111 : vector<16x128xf32>
    %113 = arith.index_cast %c0_i32 : i32 to index
    %c0_2 = arith.constant 0 : index
    %c0_3 = arith.constant 0 : index
    %114 = vector.load %arg3[%113, %c0_2, %c0_3] : memref<1x16x128xf32, #tpu.memory_space<vmem>>, vector<1x16x128xf32>
    %115 = vector.shape_cast %114 : vector<1x16x128xf32> to vector<16x128xf32>
    %116 = vector.shape_cast %112 : vector<16x128xf32> to vector<1x16x128xf32>
    tpu.vector_store %arg3[%113, %c0_2, %c0_3], %116 {strides = array<i32>} : memref<1x16x128xf32, #tpu.memory_space<vmem>>, vector<1x16x128xf32>,
    %c1_i32 = arith.constant 1 : i32
    return
  }
  func.func @transform_0(%arg0: i32) -> i32 {
    %c0_i32 = arith.constant 0 : i32
    %c0_i32_0 = arith.constant 0 : i32
    return %c0_i32 : i32
  }
  func.func @transform_1(%arg0: i32) -> (i32, i32, i32) {
    %c0_i32 = arith.constant 0 : i32
    %c0_i32_0 = arith.constant 0 : i32
    %c0_i32_1 = arith.constant 0 : i32
    return %arg0, %c0_i32, %c0_i32_0 : i32, i32, i32
  }
  func.func @transform_2(%arg0: i32) -> (i32, i32, i32) {
    %c0_i32 = arith.constant 0 : i32
    %c0_i32_0 = arith.constant 0 : i32
    %c0_i32_1 = arith.constant 0 : i32
    return %arg0, %c0_i32, %c0_i32_0 : i32, i32, i32
  }
}

</mosaic_0001>

<llo_original>
// kernel: tpu_custom_call.1
$region0: #{tpu_custom_call.1}
  #allocation0 [shape = 'u32[]', space=smem, size = 0x4, offset = 0x4, fixed_abs, tag = 'smem constant byte address 0x4 - core index']
  #allocation1 [shape = 'u32[144,128]{1,0:T(1,128)}', space=vmem, size = 0x12000, scoped, tag = 'internal scratch']
  %s0 = inlined_call_operand.hbm [shape: f32[32], index: 0, kind: input, shape index: {}]
  %s1 = inlined_call_operand.hbm [shape: f32[1,16,128], index: 1, kind: input, shape index: {}]
  %s2 = inlined_call_operand.hbm [shape: f32[1,16,128], index: 2, kind: output, shape index: {}]
  %s3 = sld [smem:[#allocation0]]
  $region26: #{tpu_custom_call.1} parent=0
    _
  %s5 = ssub.s32 1, %s3
  %s6 = scalar_select 0, %s5, %s3
  $region1: #{tpu_custom_call.1} parent=0
    #allocation2 [shape = 'u8[512]{0}', space=smem, size = 0x200, scoped, tag = 'input window, operand 0, single buffered']
    #allocation3 [shape = 's32[1]{0}', space=sflag, size = 0x4, scoped, tag = 'scoped memory for tpu_custom_call.1']
    #allocation4 [shape = 's32[1]{0}', space=sflag, size = 0x4, scoped, tag = 'scoped memory for tpu_custom_call.1']
    #allocation5 [shape = 's32[1]{0}', space=sflag, size = 0x4, scoped, tag = 'scoped memory for tpu_custom_call.1']
    #allocation6 [shape = 'u8[8192]{0}', space=vmem, size = 0x2000, scoped, tag = 'input window, operand 1, single buffered']
    #allocation7 [shape = 'u8[8192]{0}', space=vmem, size = 0x2000, scoped, tag = 'output window, operand 0, single buffered']
    %7 = vsyncpa [#allocation5], 0
    %8 = vsyncpa [#allocation3], 0
    %9 = vsyncpa [#allocation4], 0
    // Predicated region
    $region2: #{tpu_custom_call.1} parent=1 // pred_check
      _
    $region3: #{tpu_custom_call.1} parent=1 // pred_check_branch
      %11 = sbr.rel (0) target = $region5
    $region4: #{tpu_custom_call.1} parent=1 // pred_region
      %s13 = ssub.s32 16, 16
      %14 = vsyncadd [#allocation5], %s13
      %17 = dma.hbm_to_smem %s0, 16, [#allocation2], [#allocation5]
    $region5: #{tpu_custom_call.1} parent=1 // pred_fallthru
      _
    // Predicated region
    $region6: #{tpu_custom_call.1} parent=1 // pred_check
      _
    $region7: #{tpu_custom_call.1} parent=1 // pred_check_branch
      %19 = sbr.rel (0) target = $region9
    $region8: #{tpu_custom_call.1} parent=1 // pred_region
      %s21 = ssub.s32 256, 256
      %22 = vsyncadd [#allocation3], %s21
      %s23 = sshll.u32 [#allocation6], 4
      %s24 = int_to_ptr.vmem [resolvable:$true] %s23
      %29 = dma.hbm_to_vmem [thread:$0]  %s1, 256, %s24, [#allocation3], 128, 128, 8
    $region9: #{tpu_custom_call.1} parent=1 // pred_fallthru
      _
    // Predicated region
    $region10: #{tpu_custom_call.1} parent=1 // pred_check
      _
    $region11: #{tpu_custom_call.1} parent=1 // pred_check_branch
      %31 = sbr.rel (0) target = $region13
    $region12: #{tpu_custom_call.1} parent=1 // pred_region
      %32 = dma.done [#allocation5], 16
    $region13: #{tpu_custom_call.1} parent=1 // pred_fallthru
      _
    // Predicated region
    $region14: #{tpu_custom_call.1} parent=1 // pred_check
      _
    $region15: #{tpu_custom_call.1} parent=1 // pred_check_branch
      %34 = sbr.rel (0) target = $region17
    $region16: #{tpu_custom_call.1} parent=1 // pred_region
      %35 = dma.done [#allocation3], 256
    $region17: #{tpu_custom_call.1} parent=1 // pred_fallthru
      _
    %36 = sfence
    %s37 = sld [smem:[#allocation2]]
    %s38 = sld [smem:[#allocation2 + $0x1]]
    %s39 = sld [smem:[#allocation2 + $0x2]]
    %s40 = sld [smem:[#allocation2 + $0x3]]
    %s41 = sld [smem:[#allocation2 + $0x4]]
    %s42 = sld [smem:[#allocation2 + $0x5]]
    %s43 = sld [smem:[#allocation2 + $0x6]]
    %s44 = sld [smem:[#allocation2 + $0x7]]
    %s45 = sld [smem:[#allocation2 + $0x8]]
    %s46 = sld [smem:[#allocation2 + $0x9]]
    %s47 = sld [smem:[#allocation2 + $0xa]]
    %s48 = sld [smem:[#allocation2 + $0xb]]
    %s49 = sld [smem:[#allocation2 + $0xc]]
    %s50 = sld [smem:[#allocation2 + $0xd]]
    %s51 = sld [smem:[#allocation2 + $0xe]]
    %s52 = sld [smem:[#allocation2 + $0xf]]
    %s53 = sld [smem:[#allocation2 + $0x10]]
    %s54 = sld [smem:[#allocation2 + $0x11]]
    %s55 = sld [smem:[#allocation2 + $0x12]]
    %s56 = sld [smem:[#allocation2 + $0x13]]
    %s57 = sld [smem:[#allocation2 + $0x14]]
    %s58 = sld [smem:[#allocation2 + $0x15]]
    %s59 = sld [smem:[#allocation2 + $0x16]]
    %s60 = sld [smem:[#allocation2 + $0x17]]
    %s61 = sld [smem:[#allocation2 + $0x18]]
    %s62 = sld [smem:[#allocation2 + $0x19]]
    %v63 = vstv %s62
    %v64 = vld [vmem:[#allocation6] sm:$0xff]
    %v65 = vld [vmem:[#allocation6 + $0x8] sm:$0xff]
    %66 = vrot.lane.b32.xlu0 %v64, 127
    %v67 = vpop.permute.xlu0 %66
    %68 = vrot.lane.b32.xlu0 %v65, 127
    %v69 = vpop.permute.xlu0 %68
    %70 = vrot.lane.b32.xlu0 %v64, 126
    %v71 = vpop.permute.xlu0 %70
    %72 = vrot.lane.b32.xlu0 %v65, 126
    %v73 = vpop.permute.xlu0 %72
    %74 = vrot.lane.b32.xlu0 %v64, 125
    %v75 = vpop.permute.xlu0 %74
    %76 = vrot.lane.b32.xlu0 %v65, 125
    %v77 = vpop.permute.xlu0 %76
    %78 = vrot.lane.b32.xlu0 %v64, 124
    %v79 = vpop.permute.xlu0 %78
    %80 = vrot.lane.b32.xlu0 %v65, 124
    %v81 = vpop.permute.xlu0 %80
    %v82 = vstv %s37
    %v83 = vmul.f32 %v64, %v82
    %v84 = vmul.f32 %v65, %v82
    %v85 = vstv %s38
    %v86 = vmul.f32 %v67, %v85
    %v87 = vmul.f32 %v69, %v85
    %v88 = vadd.f32 %v83, %v86
    %v89 = vadd.f32 %v84, %v87
    %v90 = vstv %s39
    %v91 = vmul.f32 %v71, %v90
    %v92 = vmul.f32 %v73, %v90
    %v93 = vadd.f32 %v88, %v91
    %v94 = vadd.f32 %v89, %v92
    %v95 = vstv %s40
    %v96 = vmul.f32 %v75, %v95
    %v97 = vmul.f32 %v77, %v95
    %v98 = vadd.f32 %v93, %v96
    %v99 = vadd.f32 %v94, %v97
    %v100 = vstv %s41
    %v101 = vmul.f32 %v79, %v100
    %v102 = vmul.f32 %v81, %v100
    %v103 = vadd.f32 %v98, %v101
    %v104 = vadd.f32 %v99, %v102
    %v105 = vadd.f32 %v63, %v103
    %v106 = vadd.f32 %v63, %v104
    %v107 = vstv %s42
    %v108 = vmul.f32 %v64, %v107
    %v109 = vmul.f32 %v65, %v107
    %v110 = vstv %s43
    %v111 = vmul.f32 %v67, %v110
    %v112 = vmul.f32 %v69, %v110
    %v113 = vadd.f32 %v108, %v111
    %v114 = vadd.f32 %v109, %v112
    %v115 = vstv %s44
    %v116 = vmul.f32 %v71, %v115
    %v117 = vmul.f32 %v73, %v115
    %v118 = vadd.f32 %v113, %v116
    %v119 = vadd.f32 %v114, %v117
    %v120 = vstv %s45
    %v121 = vmul.f32 %v75, %v120
    %v122 = vmul.f32 %v77, %v120
    %v123 = vadd.f32 %v118, %v121
    %v124 = vadd.f32 %v119, %v122
    %v125 = vstv %s46
    %v126 = vmul.f32 %v79, %v125
    %v127 = vmul.f32 %v81, %v125
    %v128 = vadd.f32 %v123, %v126
    %v129 = vadd.f32 %v124, %v127
    %v130 = vrot.slane %v128, 1
    %v131 = vrot.slane %v129, 1
    %v132 = vlaneseq
    %v133 = vshrl.u32 %v132, 7
    %vm134 = vcmp.lt.s32.totalorder %v133, 7
    %v135 = vsel %vm134, %v130, %v131
    %v136 = vsel %vm134, %v131, %v130
    %v137 = vadd.f32 %v105, %v135
    %v138 = vadd.f32 %v106, %v136
    %v139 = vstv %s47
    %v140 = vmul.f32 %v64, %v139
    %v141 = vmul.f32 %v65, %v139
    %v142 = vstv %s48
    %v143 = vmul.f32 %v67, %v142
    %v144 = vmul.f32 %v69, %v142
    %v145 = vadd.f32 %v140, %v143
    %v146 = vadd.f32 %v141, %v144
    %v147 = vstv %s49
    %v148 = vmul.f32 %v71, %v147
    %v149 = vmul.f32 %v73, %v147
    %v150 = vadd.f32 %v145, %v148
    %v151 = vadd.f32 %v146, %v149
    %v152 = vstv %s50
    %v153 = vmul.f32 %v75, %v152
    %v154 = vmul.f32 %v77, %v152
    %v155 = vadd.f32 %v150, %v153
    %v156 = vadd.f32 %v151, %v154
    %v157 = vstv %s51
    %v158 = vmul.f32 %v79, %v157
    %v159 = vmul.f32 %v81, %v157
    %v160 = vadd.f32 %v155, %v158
    %v161 = vadd.f32 %v156, %v159
    %v162 = vrot.slane %v160, 2
    %v163 = vrot.slane %v161, 2
    %vm164 = vcmp.lt.s32.totalorder %v133, 6
    %v165 = vsel %vm164, %v162, %v163
    %v166 = vsel %vm164, %v163, %v162
    %v167 = vadd.f32 %v137, %v165
    %v168 = vadd.f32 %v138, %v166
    %v169 = vstv %s52
    %v170 = vmul.f32 %v64, %v169
    %v171 = vmul.f32 %v65, %v169
    %v172 = vstv %s53
    %v173 = vmul.f32 %v67, %v172
    %v174 = vmul.f32 %v69, %v172
    %v175 = vadd.f32 %v170, %v173
    %v176 = vadd.f32 %v171, %v174
    %v177 = vstv %s54
    %v178 = vmul.f32 %v71, %v177
    %v179 = vmul.f32 %v73, %v177
    %v180 = vadd.f32 %v175, %v178
    %v181 = vadd.f32 %v176, %v179
    %v182 = vstv %s55
    %v183 = vmul.f32 %v75, %v182
    %v184 = vmul.f32 %v77, %v182
    %v185 = vadd.f32 %v180, %v183
    %v186 = vadd.f32 %v181, %v184
    %v187 = vstv %s56
    %v188 = vmul.f32 %v79, %v187
    %v189 = vmul.f32 %v81, %v187
    %v190 = vadd.f32 %v185, %v188
    %v191 = vadd.f32 %v186, %v189
    %v192 = vrot.slane %v190, 3
    %v193 = vrot.slane %v191, 3
    %vm194 = vcmp.lt.s32.totalorder %v133, 5
    %v195 = vsel %vm194, %v192, %v193
    %v196 = vsel %vm194, %v193, %v192
    %v197 = vadd.f32 %v167, %v195
    %v198 = vadd.f32 %v168, %v196
    %v199 = vstv %s57
    %v200 = vmul.f32 %v64, %v199
    %v201 = vmul.f32 %v65, %v199
    %v202 = vstv %s58
    %v203 = vmul.f32 %v67, %v202
    %v204 = vmul.f32 %v69, %v202
    %v205 = vadd.f32 %v200, %v203
    %v206 = vadd.f32 %v201, %v204
    %v207 = vstv %s59
    %v208 = vmul.f32 %v71, %v207
    %v209 = vmul.f32 %v73, %v207
    %v210 = vadd.f32 %v205, %v208
    %v211 = vadd.f32 %v206, %v209
    %v212 = vstv %s60
    %v213 = vmul.f32 %v75, %v212
    %v214 = vmul.f32 %v77, %v212
    %v215 = vadd.f32 %v210, %v213
    %v216 = vadd.f32 %v211, %v214
    %v217 = vstv %s61
    %v218 = vmul.f32 %v79, %v217
    %v219 = vmul.f32 %v81, %v217
    %v220 = vadd.f32 %v215, %v218
    %v221 = vadd.f32 %v216, %v219
    %v222 = vrot.slane %v220, 4
    %v223 = vrot.slane %v221, 4
    %vm224 = vcmp.lt.s32.totalorder %v133, 4
    %v225 = vsel %vm224, %v222, %v223
    %v226 = vsel %vm224, %v223, %v222
    %v227 = vadd.f32 %v197, %v225
    %v228 = vadd.f32 %v198, %v226
    %229 = vst [vmem:[#allocation7] sm:$0xff] %v227
    %230 = vst [vmem:[#allocation7 + $0x8] sm:$0xff] %v228
    // Predicated region
    $region18: #{tpu_custom_call.1} parent=1 // pred_check
      _
    $region19: #{tpu_custom_call.1} parent=1 // pred_check_branch
      %232 = sbr.rel (0) target = $region21
    $region20: #{tpu_custom_call.1} parent=1 // pred_region
      %s234 = ssub.s32 256, 256
      %235 = vsyncadd [#allocation4], %s234
      %s236 = sshll.u32 [#allocation7], 4
      %s237 = int_to_ptr.vmem [resolvable:$true] %s236
      %242 = dma.vmem_to_hbm [thread:$0]  %s237, 256, %s2, [#allocation4], 128, 128, 8
    $region21: #{tpu_custom_call.1} parent=1 // pred_fallthru
      _
    // Predicated region
    $region22: #{tpu_custom_call.1} parent=1 // pred_check
      _
    $region23: #{tpu_custom_call.1} parent=1 // pred_check_branch
      %244 = sbr.rel (0) target = $region25
    $region24: #{tpu_custom_call.1} parent=1 // pred_region
      %245 = dma.done [#allocation4], 256
    $region25: #{tpu_custom_call.1} parent=1 // pred_fallthru
      _
    %246 = vsyncpa [#allocation3], 1
    %247 = vsyncpa [#allocation4], 1
    %248 = vsyncpa [#allocation5], 1

</llo_original>
